<compile_context>
chip_gen: v5e
topology: v5e:2x2
jax: 0.10.0
libtpu: 0.0.40
codegen_flags: <defaults>
</compile_context>

<pallas_src>
import functools

import jax
import jax.numpy as jnp
from jax.experimental import pallas as pl
from jax.experimental.pallas import tpu as pltpu


def _pow_gamma(x, gamma):
    """x ** gamma, using repeated multiplies when gamma is a non-negative integer."""
    g = float(gamma)
    if g.is_integer() and g >= 0:
        n = int(g)
        if n == 0:
            return jnp.ones_like(x)
        r = x
        for _ in range(n - 1):
            r = r * x
        return r
    # TODO(synk): non-integer gamma with a negative base (possible if class_weights <= 0)
    # yields NaN, exactly like torch; not clamped here to preserve reference semantics.
    return x ** g


def _focal_kernel(logits_ref, targets_ref, wsel_ref, out_ref, *scratch,
                  alpha, gamma, reduction, n_valid, inv_n, tile_n):
    i = pl.program_id(0)

    logits = logits_ref[...].astype(jnp.float32)     # (C, T)  classes on sublanes
    tgt = targets_ref[...]                           # (1, T)  int32
    w_t = wsel_ref[...]                              # (1, T)  class_weights[target]

    # Numerically stable log-sum-exp over the class (sublane) axis.
    m = jnp.max(logits, axis=0, keepdims=True)                    # (1, T)
    z = logits - m                                                 # (C, T)
    lse = jnp.log(jnp.sum(jnp.exp(z), axis=0, keepdims=True))      # (1, T)

    # Gather z at the target class via one-hot reduce (no full log-softmax materialized).
    cls = jax.lax.broadcasted_iota(jnp.int32, z.shape, 0)          # (C, T)
    onehot = (cls == tgt).astype(jnp.float32)                      # (C, T)
    z_t = jnp.sum(onehot * z, axis=0, keepdims=True)               # (1, T)

    ce = w_t * (lse - z_t)                                         # weighted CE, 'none'
    pt = jnp.exp(-ce)
    focal = _pow_gamma(1.0 - pt, gamma) * ce                       # (1, T)
    if alpha != 1.0:
        focal = alpha * focal

    # Zero out lanes that correspond to padded samples.
    lane = jax.lax.broadcasted_iota(jnp.int32, focal.shape, 1)     # (1, T)
    valid = (i * tile_n + lane) < n_valid
    focal = jnp.where(valid, focal, 0.0)

    if reduction == 'none':
        out_ref[...] = focal
    else:
        acc = scratch[0]                                           # (1, T) f32, persists across grid

        @pl.when(i == 0)
        def _():
            acc[...] = jnp.zeros_like(acc)

        acc[...] += focal                                          # lane-wise partial sums

        @pl.when(i == pl.num_programs(0) - 1)
        def _():
            total = jnp.sum(acc[...])                              # single cross-lane reduce
            if reduction == 'mean':
                total = total * inv_n
            out_ref[...] = total.reshape(1, 1)


def weighted_focal_loss(logits, targets, class_weights,
                        alpha=1.0, gamma=2.0, reduction='mean', tile_n=512):
    assert reduction in ('mean', 'sum', 'none')
    n, c = logits.shape

    # Keep tiles lane-aligned (multiple of 128); shrink for tiny problems to limit padding.
    tile_n_eff = min(int(tile_n), max(128, ((n + 127) // 128) * 128))
    tile_n_eff = max(128, (tile_n_eff // 128) * 128)
    num_tiles = pl.cdiv(n, tile_n_eff)
    n_pad = num_tiles * tile_n_eff
    pad = n_pad - n

    cw = jnp.asarray(class_weights, jnp.float32).reshape(-1)
    targets = targets.astype(jnp.int32).reshape(-1)

    # Lane-dense transposed layout: classes on sublanes, samples on lanes.
    # Logits stay in their native dtype through the HBM->VMEM DMA; upcast happens per tile.
    logits_t = jnp.transpose(logits, (1, 0))                       # (C, N)
    if pad:
        logits_t = jnp.pad(logits_t, ((0, 0), (0, pad)))
        targets = jnp.pad(targets, (0, pad))
    targets_2d = targets.reshape(1, n_pad)
    # Hoisted weight gather: tiny XLA gather over N elements.
    wsel_2d = jnp.take(cw, targets, axis=0).astype(jnp.float32).reshape(1, n_pad)

    in_specs = [
        pl.BlockSpec((c, tile_n_eff), lambda i: (0, i)),
        pl.BlockSpec((1, tile_n_eff), lambda i: (0, i)),
        pl.BlockSpec((1, tile_n_eff), lambda i: (0, i)),
    ]
    if reduction in ('mean', 'sum'):
        out_shape = jax.ShapeDtypeStruct((1, 1), jnp.float32)
        out_specs = pl.BlockSpec((1, 1), lambda i: (0, 0))         # resident accumulator output
        scratch_shapes = [pltpu.VMEM((1, tile_n_eff), jnp.float32)]
        dims = ("arbitrary",)
    else:
        out_shape = jax.ShapeDtypeStruct((1, n_pad), jnp.float32)
        out_specs = pl.BlockSpec((1, tile_n_eff), lambda i: (0, i))  # lane-dense row store
        scratch_shapes = []
        dims = ("parallel",)

    # VMEM budget: double-buffered inputs + f32 working set + scratch/output, with headroom.
    itemsize = jnp.dtype(logits.dtype).itemsize
    vmem_bytes = 2 * (c * tile_n_eff * itemsize + 2 * tile_n_eff * 4)   # pipelined input buffers
    vmem_bytes += 6 * c * tile_n_eff * 4                                # f32 (C,T) temporaries
    vmem_bytes += 10 * tile_n_eff * 4                                   # (1,T) temporaries + acc + out
    vmem_limit = int(min(64 * 1024 * 1024, max(4 * 1024 * 1024, 2 * vmem_bytes)))

    kernel = functools.partial(
        _focal_kernel,
        alpha=float(alpha), gamma=float(gamma), reduction=reduction,
        n_valid=int(n), inv_n=1.0 / float(n), tile_n=int(tile_n_eff))

    out = pl.pallas_call(
        kernel,
        out_shape=out_shape,
        grid_spec=pltpu.PrefetchScalarGridSpec(
            num_scalar_prefetch=0,
            grid=(num_tiles,),
            in_specs=in_specs,
            out_specs=out_specs,
            scratch_shapes=scratch_shapes),
        compiler_params=pltpu.CompilerParams(
            dimension_semantics=dims,
            vmem_limit_bytes=vmem_limit),
    )(logits_t, targets_2d, wsel_2d)

    if reduction in ('mean', 'sum'):
        return out[0, 0]
    return out[0, :n]


def _reference_loss(logits, targets, class_weights, alpha, gamma, reduction):
    """Pure-JAX reference replicating the PyTorch forward exactly."""
    logp = jax.nn.log_softmax(logits.astype(jnp.float32), axis=-1)
    nll = -jnp.take_along_axis(logp, targets[:, None], axis=-1)[:, 0]
    ce = class_weights[targets] * nll
    pt = jnp.exp(-ce)
    focal = alpha * (1.0 - pt) ** gamma * ce
    if reduction == 'mean':
        return focal.mean()
    elif reduction == 'sum':
        return focal.sum()
    return focal


if __name__ == "__main__":
    key = jax.random.PRNGKey(0)
    alpha, gamma = 1.0, 2.0

    # Case 1: small classification problem, single tile.
    k1, k2, k3, k4 = jax.random.split(key, 4)
    N1, C1 = 16, 8
    logits1 = jax.random.normal(k1, (N1, C1), dtype=jnp.float32)
    targets1 = jax.random.randint(k2, (N1,), 0, C1, dtype=jnp.int32)
    cw1 = jnp.linspace(0.5, 2.0, C1, dtype=jnp.float32)

    # Case 2: exercises the grid (multiple tiles + tail padding) and the accumulator.
    N2, C2 = 300, 8
    logits2 = jax.random.normal(k3, (N2, C2), dtype=jnp.float32)
    targets2 = jax.random.randint(k4, (N2,), 0, C2, dtype=jnp.int32)
    cw2 = jnp.linspace(0.25, 1.5, C2, dtype=jnp.float32)

    ok = True
    for (lg, tg, cw, tile) in ((logits1, targets1, cw1, 512),
                               (logits2, targets2, cw2, 128)):
        for reduction in ('mean', 'sum', 'none'):
            got = weighted_focal_loss(lg, tg, cw, alpha=alpha, gamma=gamma,
                                      reduction=reduction, tile_n=tile)
            got = jax.block_until_ready(got)
            ref = _reference_loss(lg, tg, cw, alpha, gamma, reduction)
            if not jnp.allclose(got, ref, rtol=1e-5, atol=1e-5):
                ok = False
                print("MISMATCH", reduction, got, ref)

    assert ok
    print("KERNEL_OK")
</pallas_src>

<mosaic_0001>
module attributes {stable_mosaic.version = 11 : i64} {
  func.func @_focal_kernel(%arg0: i32, %arg1: memref<8x128xf32, #tpu.memory_space<vmem>>, %arg2: memref<1x128xi32, #tpu.memory_space<vmem>>, %arg3: memref<1x128xf32, #tpu.memory_space<vmem>>, %arg4: memref<1x1xf32, #tpu.memory_space<vmem>>, %arg5: memref<1x128xf32, #tpu.memory_space<vmem>>) attributes {dimension_semantics = [#tpu.dimension_semantics<arbitrary>], iteration_bounds = array<i64: 1>, scalar_prefetch = 0 : i64, scratch_operands = 1 : i64, tpu.core_type = #tpu.core_type<tc>, window_params = [{transform_indices = @transform_0, window_bounds = array<i64: 8, 128>}, {transform_indices = @transform_1, window_bounds = array<i64: 1, 128>}, {transform_indices = @transform_2, window_bounds = array<i64: 1, 128>}, {pipeline_mode = #tpu.pipeline_mode<synchronous>, transform_indices = @transform_3, window_bounds = array<i64: 1, 1>}]} {
    %c0 = arith.constant 0 : index
    %c0_0 = arith.constant 0 : index
    %0 = vector.load %arg1[%c0, %c0_0] : memref<8x128xf32, #tpu.memory_space<vmem>>, vector<8x128xf32>
    %c0_1 = arith.constant 0 : index
    %c0_2 = arith.constant 0 : index
    %1 = vector.load %arg2[%c0_1, %c0_2] : memref<1x128xi32, #tpu.memory_space<vmem>>, vector<1x128xi32>
    %c0_3 = arith.constant 0 : index
    %c0_4 = arith.constant 0 : index
    %2 = vector.load %arg3[%c0_3, %c0_4] : memref<1x128xf32, #tpu.memory_space<vmem>>, vector<1x128xf32>
    %cst = arith.constant dense<0xFF800000> : vector<128xf32>
    %3 = vector.multi_reduction <maximumf>, %0, %cst [0] : vector<8x128xf32> to vector<128xf32>
    %4 = vector.shape_cast %3 : vector<128xf32> to vector<1x128xf32>
    %5 = vector.broadcast %4 : vector<1x128xf32> to vector<8x128xf32>
    %6 = arith.subf %0, %5 : vector<8x128xf32>
    %7 = math.exp %6 : vector<8x128xf32>
    %cst_5 = arith.constant dense<0.000000e+00> : vector<128xf32>
    %8 = vector.multi_reduction <add>, %7, %cst_5 [0] : vector<8x128xf32> to vector<128xf32>
    %9 = vector.shape_cast %8 : vector<128xf32> to vector<1x128xf32>
    %10 = math.log %9 : vector<1x128xf32>
    %11 = tpu.iota {dimensions = array<i32: 0>} : vector<8x128xi32>
    %12 = vector.broadcast %1 : vector<1x128xi32> to vector<8x128xi32>
    %13 = arith.cmpi eq, %11, %12 : vector<8x128xi32>
    %14 = arith.extui %13 : vector<8x128xi1> to vector<8x128xi32>
    %15 = arith.sitofp %14 : vector<8x128xi32> to vector<8x128xf32>
    %16 = arith.mulf %15, %6 : vector<8x128xf32>
    %cst_6 = arith.constant dense<0.000000e+00> : vector<128xf32>
    %17 = vector.multi_reduction <add>, %16, %cst_6 [0] : vector<8x128xf32> to vector<128xf32>
    %18 = vector.shape_cast %17 : vector<128xf32> to vector<1x128xf32>
    %19 = arith.subf %10, %18 : vector<1x128xf32>
    %20 = arith.mulf %2, %19 : vector<1x128xf32>
    %cst_7 = arith.constant 0.000000e+00 : f32
    %21 = vector.broadcast %cst_7 : f32 to vector<1x128xf32>
    %22 = arith.subf %21, %20 : vector<1x128xf32>
    %23 = math.exp %22 : vector<1x128xf32>
    %cst_8 = arith.constant 1.000000e+00 : f32
    %24 = vector.broadcast %cst_8 : f32 to vector<1x128xf32>
    %25 = arith.subf %24, %23 : vector<1x128xf32>
    %26 = arith.mulf %25, %25 : vector<1x128xf32>
    %27 = arith.mulf %26, %20 : vector<1x128xf32>
    %28 = tpu.iota {dimensions = array<i32: 1>} : vector<1x128xi32>
    %c128_i32 = arith.constant 128 : i32
    %29 = arith.muli %arg0, %c128_i32 : i32
    %30 = vector.broadcast %29 : i32 to vector<1x128xi32>
    %31 = arith.addi %30, %28 : vector<1x128xi32>
    %c16_i32 = arith.constant 16 : i32
    %32 = vector.broadcast %c16_i32 : i32 to vector<1x128xi32>
    %33 = arith.cmpi slt, %31, %32 : vector<1x128xi32>
    %cst_9 = arith.constant 0.000000e+00 : f32
    %34 = vector.broadcast %cst_9 : f32 to vector<1x128xf32>
    %35 = arith.select %33, %27, %34 : vector<1x128xi1>, vector<1x128xf32>
    %c0_i32 = arith.constant 0 : i32
    %36 = arith.cmpi eq, %arg0, %c0_i32 : i32
    %37 = arith.extui %36 : i1 to i32
    %c0_i32_10 = arith.constant 0 : i32
    %38 = arith.cmpi ne, %37, %c0_i32_10 : i32
    scf.if %38 {
      %cst_17 = arith.constant 0.000000e+00 : f32
      %45 = vector.broadcast %cst_17 : f32 to vector<1x128xf32>
      %c0_18 = arith.constant 0 : index
      %c0_19 = arith.constant 0 : index
      %46 = vector.load %arg5[%c0_18, %c0_19] : memref<1x128xf32, #tpu.memory_space<vmem>>, vector<1x128xf32>
      tpu.vector_store %arg5[%c0_18, %c0_19], %45 {strides = array<i32>} : memref<1x128xf32, #tpu.memory_space<vmem>>, vector<1x128xf32>,
    } else {
    }
    %c0_11 = arith.constant 0 : index
    %c0_12 = arith.constant 0 : index
    %39 = vector.load %arg5[%c0_11, %c0_12] : memref<1x128xf32, #tpu.memory_space<vmem>>, vector<1x128xf32>
    %40 = arith.addf %39, %35 : vector<1x128xf32>
    %c0_13 = arith.constant 0 : index
    %c0_14 = arith.constant 0 : index
    %41 = vector.load %arg5[%c0_13, %c0_14] : memref<1x128xf32, #tpu.memory_space<vmem>>, vector<1x128xf32>
    tpu.vector_store %arg5[%c0_13, %c0_14], %40 {strides = array<i32>} : memref<1x128xf32, #tpu.memory_space<vmem>>, vector<1x128xf32>,
    %c0_i32_15 = arith.constant 0 : i32
    %42 = arith.cmpi eq, %arg0, %c0_i32_15 : i32
    %43 = arith.extui %42 : i1 to i32
    %c0_i32_16 = arith.constant 0 : i32
    %44 = arith.cmpi ne, %43, %c0_i32_16 : i32
    scf.if %44 {
      %c0_17 = arith.constant 0 : index
      %c0_18 = arith.constant 0 : index
      %45 = vector.load %arg5[%c0_17, %c0_18] : memref<1x128xf32, #tpu.memory_space<vmem>>, vector<1x128xf32>
      %46 = vector.shape_cast %45 : vector<1x128xf32> to vector<1x1x128xf32>
      %cst_19 = arith.constant dense<0.000000e+00> : vector<1xf32>
      %47 = vector.multi_reduction <add>, %46, %cst_19 [1, 2] : vector<1x1x128xf32> to vector<1xf32>
      %48 = vector.shape_cast %47 : vector<1xf32> to vector<1x1x1xf32>
      %49 = vector.extract %48[0, 0, 0] : f32 from vector<1x1x1xf32>
      %cst_20 = arith.constant 6.250000e-02 : f32
      %50 = arith.mulf %49, %cst_20 : f32
      %51 = vector.broadcast %50 : f32 to vector<1x1xf32>
      %c0_21 = arith.constant 0 : index
      %c0_22 = arith.constant 0 : index
      %52 = vector.load %arg4[%c0_21, %c0_22] : memref<1x1xf32, #tpu.memory_space<vmem>>, vector<1x1xf32>
      tpu.vector_store %arg4[%c0_21, %c0_22], %51 {strides = array<i32>} : memref<1x1xf32, #tpu.memory_space<vmem>>, vector<1x1xf32>,
    } else {
    }
    return
  }
  func.func @transform_0(%arg0: i32) -> (i32, i32) {
    %c0_i32 = arith.constant 0 : i32
    %c0_i32_0 = arith.constant 0 : i32
    return %c0_i32, %arg0 : i32, i32
  }
  func.func @transform_1(%arg0: i32) -> (i32, i32) {
    %c0_i32 = arith.constant 0 : i32
    %c0_i32_0 = arith.constant 0 : i32
    return %c0_i32, %arg0 : i32, i32
  }
  func.func @transform_2(%arg0: i32) -> (i32, i32) {
    %c0_i32 = arith.constant 0 : i32
    %c0_i32_0 = arith.constant 0 : i32
    return %c0_i32, %arg0 : i32, i32
  }
  func.func @transform_3(%arg0: i32) -> (i32, i32) {
    %c0_i32 = arith.constant 0 : i32
    %c0_i32_0 = arith.constant 0 : i32
    %c0_i32_1 = arith.constant 0 : i32
    return %c0_i32, %c0_i32_0 : i32, i32
  }
}

</mosaic_0001>

<llo_original>
// kernel: tpu_custom_call.1
$region0: #{tpu_custom_call.1}
  #allocation0 [shape = 'u32[]', space=smem, size = 0x4, offset = 0x4, fixed_abs, tag = 'smem constant byte address 0x4 - core index']
  #allocation1 [shape = 'u32[72,128]{1,0:T(1,128)}', space=vmem, size = 0x9000, scoped, tag = 'internal scratch']
  #allocation2 [shape = 'f32[1,128]{1,0:T(1,128)}', space=vmem, size = 0x200, scoped, tag = 'scratch operand']
  %s0 = inlined_call_operand.hbm [shape: f32[8,128], index: 0, kind: input, shape index: {}]
  %s1 = inlined_call_operand.hbm [shape: s32[1,128], index: 1, kind: input, shape index: {}]
  %s2 = inlined_call_operand.vmem [shape: f32[1,128], index: 2, kind: input, shape index: {}]
  %s3 = inlined_call_operand.hbm [shape: f32[1,1], index: 3, kind: output, shape index: {}]
  %s4 = sld [smem:[#allocation0]]
  $region38: #{tpu_custom_call.1} parent=0
    _
  %s6 = ssub.s32 1, %s4
  %s7 = scalar_select 0, %s6, %s4
  $region1: #{tpu_custom_call.1} parent=0
    #allocation3 [shape = 'u8[4096]{0}', space=vmem, size = 0x1000, scoped, tag = 'input window, operand 0, single buffered']
    #allocation4 [shape = 's32[1]{0}', space=sflag, size = 0x4, scoped, tag = 'scoped memory for tpu_custom_call.1']
    #allocation5 [shape = 's32[1]{0}', space=sflag, size = 0x4, scoped, tag = 'scoped memory for tpu_custom_call.1']
    #allocation6 [shape = 'u8[512]{0}', space=vmem, size = 0x400, scoped, tag = 'input window, operand 1, single buffered']
    #allocation7 [shape = 's32[1]{0}', space=sflag, size = 0x4, scoped, tag = 'scoped memory for tpu_custom_call.1']
    #allocation8 [shape = 'u8[512]{0}', space=vmem, size = 0x400, scoped, tag = 'output window, operand 0, single buffered']
    %8 = vsyncpa [#allocation4], 0
    %9 = vsyncpa [#allocation7], 0
    %10 = vsyncpa [#allocation5], 0
    // Predicated region
    $region2: #{tpu_custom_call.1} parent=1 // pred_check
      _
    $region3: #{tpu_custom_call.1} parent=1 // pred_check_branch
      %12 = sbr.rel (0) target = $region5
    $region4: #{tpu_custom_call.1} parent=1 // pred_region
      %14 = vsyncadd [#allocation4], 0
      %s16 = sshll.u32 %s0, 4
      %s17 = int_to_ptr.hbm [resolvable:$true] %s16
      %s18 = sshll.u32 [#allocation3], 4
      %s19 = int_to_ptr.vmem [resolvable:$true] %s18
      %21 = dma.hbm_to_vmem [thread:$0]  %s17, 128, %s19, [#allocation4]
    $region5: #{tpu_custom_call.1} parent=1 // pred_fallthru
      _
    // Predicated region
    $region6: #{tpu_custom_call.1} parent=1 // pred_check
      _
    $region7: #{tpu_custom_call.1} parent=1 // pred_check_branch
      %23 = sbr.rel (0) target = $region9
    $region8: #{tpu_custom_call.1} parent=1 // pred_region
      %25 = vsyncadd [#allocation7], 0
      %s27 = sshll.u32 %s1, 4
      %s28 = int_to_ptr.hbm [resolvable:$true] %s27
      %s29 = sshll.u32 [#allocation6], 4
      %s30 = int_to_ptr.vmem [resolvable:$true] %s29
      %32 = dma.hbm_to_vmem [thread:$0]  %s28, 16, %s30, [#allocation7]
    $region9: #{tpu_custom_call.1} parent=1 // pred_fallthru
      _
    // Predicated region
    $region10: #{tpu_custom_call.1} parent=1 // pred_check
      _
    $region11: #{tpu_custom_call.1} parent=1 // pred_check_branch
      %34 = sbr.rel (0) target = $region13
    $region12: #{tpu_custom_call.1} parent=1 // pred_region
      _
    $region13: #{tpu_custom_call.1} parent=1 // pred_fallthru
      _
    // Predicated region
    $region14: #{tpu_custom_call.1} parent=1 // pred_check
      _
    $region15: #{tpu_custom_call.1} parent=1 // pred_check_branch
      %36 = sbr.rel (0) target = $region17
    $region16: #{tpu_custom_call.1} parent=1 // pred_region
      %38 = dma.done [#allocation4], 128
    $region17: #{tpu_custom_call.1} parent=1 // pred_fallthru
      _
    // Predicated region
    $region18: #{tpu_custom_call.1} parent=1 // pred_check
      _
    $region19: #{tpu_custom_call.1} parent=1 // pred_check_branch
      %40 = sbr.rel (0) target = $region21
    $region20: #{tpu_custom_call.1} parent=1 // pred_region
      %42 = dma.done [#allocation7], 16
    $region21: #{tpu_custom_call.1} parent=1 // pred_fallthru
      _
    %v43 = vld [vmem:[#allocation3] sm:$0xff]
    %v44 = vld [vmem:[#allocation6] sm:$0x1]
    %v45 = vld [vmem:[%s2] sm:$0x1]
    %v46 = vrot.slane %v43, 4
    %v47 = vmax.f32 %v43, %v46
    %v48 = vrot.slane %v47, 2
    %v49 = vmax.f32 %v47, %v48
    %v50 = vrot.slane %v49, 1
    %v51 = vmax.f32 %v49, %v50
    %v52 = vsub.f32 %v43, %v51
    %v53 = vmul.f32 %v52, 1.442695
    %v54 = vpow.pop %v53
    %v55 = vrot.slane %v54, 4
    %v56 = vadd.f32 %v54, %v55
    %v57 = vrot.slane %v56, 2
    %v58 = vadd.f32 %v56, %v57
    %v59 = vrot.slane %v58, 1
    %v60 = vadd.f32 %v58, %v59
    %v61 = vlog2.pop %v60
    %v62 = vmul.f32 %v61, 0.6931472
    %v63 = vlaneseq
    %v64 = vshrl.u32 %v63, 7
    %v65 = vperm.slane %v44, 0
    %vm66 = vcmp.eq.s32.totalorder %v64, %v65
    %v67 = vsel %vm66, 1, 0
    %v68 = vcvt.s32.f32 %v67
    %v69 = vmul.f32 %v68, %v52
    %v70 = vrot.slane %v69, 4
    %v71 = vadd.f32 %v69, %v70
    %v72 = vrot.slane %v71, 2
    %v73 = vadd.f32 %v71, %v72
    %v74 = vrot.slane %v73, 1
    %v75 = vadd.f32 %v73, %v74
    %v76 = vsub.f32 %v62, %v75
    %v77 = vmul.f32 %v45, %v76
    %v78 = vsub.f32 0.0, %v77
    %v79 = vmul.f32 %v78, 1.442695
    %v80 = vpow.pop %v79
    %v81 = vsub.f32 1.0, %v80
    %v82 = vmul.f32 %v81, %v81
    %v83 = vmul.f32 %v82, %v77
    %v84 = vlaneseq
    %v85 = vand.u32 %v84, 127
    %s86 = smul.u32 0, 128
    %v87 = vstv %s86
    %v88 = vadd.s32 %v87, %v85
    %vm89 = vcmp.lt.s32.totalorder %v88, 16
    %v90 = vsel %vm89, %v83, 0.0
    %p91 = scmp.eq.s32.totalorder 0, 0
    // Predicated region
    $region22: #{tpu_custom_call.1} parent=1 // pred_check
      %p92 = pneg %p91
    $region23: #{tpu_custom_call.1} parent=1 // pred_check_branch
      %94 = sbr.rel (%p92) target = $region25
    $region24: #{tpu_custom_call.1} parent=1 // pred_region
      %95 = vst [vmem:[#allocation2] sm:$0x1] 0.0
    $region25: #{tpu_custom_call.1} parent=1 // pred_fallthru
      _
    %v96 = vld [vmem:[#allocation2] sm:$0x1]
    %v97 = vadd.f32 %v96, %v90
    %98 = vst [vmem:[#allocation2] sm:$0x1] %v97
    // Predicated region
    $region26: #{tpu_custom_call.1} parent=1 // pred_check
      %p99 = pneg %p91
    $region27: #{tpu_custom_call.1} parent=1 // pred_check_branch
      %101 = sbr.rel (%p99) target = $region29
    $region28: #{tpu_custom_call.1} parent=1 // pred_region
      %v102 = vld [vmem:[#allocation2] sm:$0x1]
      %vm103 = vcmask 1040384
      %v104 = vsel %vm103, %v102, 0.0
      %105 = vadd.xlane.f32.xlu0 %v104
      %v106 = vpop.xlane.xlu0 %105
      %v107 = vrot.slane %v106, 4
      %v108 = vadd.f32 %v106, %v107
      %v109 = vrot.slane %v108, 2
      %v110 = vadd.f32 %v108, %v109
      %v111 = vrot.slane %v110, 1
      %v112 = vadd.f32 %v110, %v111
      %s113 = vtos %v112
      %s114 = smul.f32 %s113, 0.0625
      %v115 = vstv %s114
      %vm116 = vcmask 0
      %117 = vst.msk [vmem:[#allocation8] sm:$0x1] %vm116, %v115
    $region29: #{tpu_custom_call.1} parent=1 // pred_fallthru
      _
    // Predicated region
    $region30: #{tpu_custom_call.1} parent=1 // pred_check
      _
    $region31: #{tpu_custom_call.1} parent=1 // pred_check_branch
      %119 = sbr.rel (0) target = $region33
    $region32: #{tpu_custom_call.1} parent=1 // pred_region
      %121 = vsyncadd [#allocation5], 0
      %s123 = sshll.u32 [#allocation8], 4
      %s124 = int_to_ptr.vmem [resolvable:$true] %s123
      %s125 = sshll.u32 %s3, 4
      %s126 = int_to_ptr.hbm [resolvable:$true] %s125
      %128 = dma.vmem_to_hbm [thread:$0]  %s124, 16, %s126, [#allocation5]
    $region33: #{tpu_custom_call.1} parent=1 // pred_fallthru
      _
    // Predicated region
    $region34: #{tpu_custom_call.1} parent=1 // pred_check
      _
    $region35: #{tpu_custom_call.1} parent=1 // pred_check_branch
      %130 = sbr.rel (0) target = $region37
    $region36: #{tpu_custom_call.1} parent=1 // pred_region
      %132 = dma.done [#allocation5], 16
    $region37: #{tpu_custom_call.1} parent=1 // pred_fallthru
      _
    %133 = vsyncpa [#allocation4], 1
    %134 = vsyncpa [#allocation7], 1
    %135 = vsyncpa [#allocation5], 1

</llo_original>
